<compile_context>
chip_gen: v5e
topology: v5e:2x2
jax: 0.10.0
libtpu: 0.0.40
codegen_flags: <defaults>
</compile_context>

<pallas_src>
import jax
import jax.numpy as jnp
from jax.experimental import pallas as pl
from jax.experimental.pallas import tpu as pltpu


def _fused_conv_kernel(w_ref, bias_ref, x_ref, o_ref):
    # w_ref    : (Cin=2, 1, Cout, 1)  fused 1x1 conv weights (per input channel)
    # bias_ref : (1, Cout, Mp)        precomputed bias plane (interior + rings)
    # x_ref    : (Nb, Cin, Mp)        zero-padded input, spatial flattened on lanes
    # o_ref    : (Nb, Cout, Mp)
    x = x_ref[...]                                   # (Nb, Cin, Mp)
    w0 = w_ref[0]                                    # (1, Cout, 1)
    w1 = w_ref[1]                                    # (1, Cout, 1)
    conv = w0 * x[:, 0:1, :] + w1 * x[:, 1:2, :]     # (Nb, Cout, Mp)  VPU FMAs
    o_ref[...] = conv + bias_ref[...]                # bias broadcasts over Nb


def model_forward(x_nchw, w1, b1, w2, b2, other=1.0):
    """Fused conv2(conv1(x)) + other.

    x_nchw : (N, 2, H, W) float32
    w1     : (1, 2, 1, 1)   conv1 weight (PyTorch layout)
    b1     : (1,)           conv1 bias
    w2     : (9, 1, 1, 1)   conv2 weight (PyTorch layout)
    b2     : (9,)           conv2 bias
    returns: (N, 9, H + 4, W + 4) float32
    """
    N, Cin, H, W = x_nchw.shape
    Cout = w2.shape[0]
    H4, W4 = H + 4, W + 4
    M = H4 * W4
    Mp = ((M + 127) // 128) * 128          # lane-pad -> unmasked, lane-dense stores

    # ---- host-side algebraic fusion of the two 1x1 convs --------------------
    w1m = w1.reshape(1, Cin)                         # (1, Cin)
    w2m = w2.reshape(Cout, 1)                        # (Cout, 1)
    w12 = w2m @ w1m                                  # (Cout, Cin): w2[co]*w1[c]
    b_in = w2m[:, 0] * b1[0] + b2 + other            # interior + conv1-pad ring
    b_out = b2 + other                               # outermost (conv2-pad) ring

    # Single stacked weight operand: w_op[c, 0, co, 0] = w12[co, c]
    w_op = jnp.transpose(w12).reshape(Cin, 1, Cout, 1)

    # Precomputed full bias plane: b_out on the outermost ring, b_in elsewhere.
    # Zero on the lane-padding tail (sliced off after the call).
    yy = jnp.arange(H4).reshape(H4, 1)
    xx = jnp.arange(W4).reshape(1, W4)
    outer = (yy == 0) | (yy == H4 - 1) | (xx == 0) | (xx == W4 - 1)
    bias_plane = jnp.where(outer[None, :, :],
                           b_out[:, None, None],
                           b_in[:, None, None]).reshape(Cout, M)
    bias_op = jnp.pad(bias_plane, ((0, 0), (0, Mp - M))).reshape(1, Cout, Mp)

    # ---- pad input once by 2 (covers both conv paddings), flatten + lane-pad -
    xp = jnp.pad(x_nchw, ((0, 0), (0, 0), (2, 2), (2, 2)))     # (N, Cin, H4, W4)
    xpf = jnp.pad(xp.reshape(N, Cin, M), ((0, 0), (0, 0), (0, Mp - M)))

    # ---- grid: whole batch in 1 step (single-TC) or 2 parallel steps (v7x) --
    G = 2 if (N >= 2 and N % 2 == 0) else 1
    Nb = N // G

    out_flat = pl.pallas_call(
        _fused_conv_kernel,
        out_shape=jax.ShapeDtypeStruct((N, Cout, Mp), jnp.float32),
        grid_spec=pltpu.PrefetchScalarGridSpec(
            num_scalar_prefetch=0,
            grid=(G,),
            in_specs=[
                pl.BlockSpec((Cin, 1, Cout, 1), lambda g: (0, 0, 0, 0)),  # weights
                pl.BlockSpec((1, Cout, Mp), lambda g: (0, 0, 0)),         # bias plane
                pl.BlockSpec((Nb, Cin, Mp), lambda g: (g, 0, 0)),         # input
            ],
            out_specs=pl.BlockSpec((Nb, Cout, Mp), lambda g: (g, 0, 0)),
        ),
        compiler_params=pltpu.CompilerParams(
            dimension_semantics=("parallel",),
            allow_input_fusion=[False, False, True],   # fuse pad/reshape producer of x
        ),
    )(w_op, bias_op, xpf)

    return out_flat[:, :, :M].reshape(N, Cout, H4, W4)


def _reference_forward(x_nchw, w1, b1, w2, b2, other=1.0):
    """Pure-JAX reference (unfused) for correctness checking."""
    x = jnp.transpose(x_nchw, (0, 2, 3, 1))                  # NHWC
    x_p = jnp.pad(x, ((0, 0), (1, 1), (1, 1), (0, 0)))
    v1 = x_p @ w1.reshape(1, 2).T + b1                       # (N, H+2, W+2, 1)
    v1_p = jnp.pad(v1, ((0, 0), (1, 1), (1, 1), (0, 0)))
    v2 = v1_p @ w2.reshape(9, 1).T + b2 + other              # (N, H+4, W+4, 9)
    return jnp.transpose(v2, (0, 3, 1, 2))


if __name__ == "__main__":
    key = jax.random.PRNGKey(0)
    k_x, k_w1, k_b1, k_w2, k_b2 = jax.random.split(key, 5)

    # Input consistent with Conv2d(2, 1, ...): NCHW with 2 channels.
    N, C, H, W = 2, 2, 16, 16
    x = jax.random.normal(k_x, (N, C, H, W), dtype=jnp.float32)

    # PyTorch parameter shapes: (1,2,1,1), (1,), (9,1,1,1), (9,)
    w1 = jax.random.normal(k_w1, (1, 2, 1, 1), dtype=jnp.float32) * 0.5
    b1 = jax.random.normal(k_b1, (1,), dtype=jnp.float32) * 0.5
    w2 = jax.random.normal(k_w2, (9, 1, 1, 1), dtype=jnp.float32) * 0.5
    b2 = jax.random.normal(k_b2, (9,), dtype=jnp.float32) * 0.5

    fwd = jax.jit(model_forward)
    out = jax.block_until_ready(fwd(x, w1, b1, w2, b2))

    ref = _reference_forward(x, w1, b1, w2, b2, other=1.0)
    assert out.shape == (N, 9, H + 4, W + 4), out.shape
    assert jnp.allclose(out, ref, atol=1e-5, rtol=1e-5), "mismatch vs reference"

    print("KERNEL_OK")
</pallas_src>

<mosaic_0001>
module attributes {stable_mosaic.version = 11 : i64} {
  func.func @_fused_conv_kernel(%arg0: i32, %arg1: memref<2x1x9x1xf32, #tpu.memory_space<vmem>>, %arg2: memref<1x9x512xf32, #tpu.memory_space<vmem>>, %arg3: memref<1x2x512xf32, #tpu.memory_space<vmem>>, %arg4: memref<1x9x512xf32, #tpu.memory_space<vmem>>) attributes {dimension_semantics = [#tpu.dimension_semantics<parallel>], iteration_bounds = array<i64: 2>, scalar_prefetch = 0 : i64, scratch_operands = 0 : i64, tpu.core_type = #tpu.core_type<tc>, window_params = [{pipeline_mode = #tpu.pipeline_mode<synchronous>, transform_indices = @transform_0, window_bounds = array<i64: 2, 1, 9, 1>}, {pipeline_mode = #tpu.pipeline_mode<synchronous>, transform_indices = @transform_1, window_bounds = array<i64: 1, 9, 512>}, {transform_indices = @transform_2, window_bounds = array<i64: 1, 2, 512>}, {transform_indices = @transform_3, window_bounds = array<i64: 1, 9, 512>}]} {
    %c0 = arith.constant 0 : index
    %c0_0 = arith.constant 0 : index
    %c0_1 = arith.constant 0 : index
    %0 = vector.load %arg3[%c0, %c0_0, %c0_1] : memref<1x2x512xf32, #tpu.memory_space<vmem>>, vector<1x2x512xf32>
    %c0_2 = arith.constant 0 : index
    %c0_3 = arith.constant 0 : index
    %c0_4 = arith.constant 0 : index
    %c0_5 = arith.constant 0 : index
    %1 = vector.load %arg1[%c0_2, %c0_3, %c0_4, %c0_5] : memref<2x1x9x1xf32, #tpu.memory_space<vmem>>, vector<1x1x9x1xf32>
    %2 = vector.shape_cast %1 : vector<1x1x9x1xf32> to vector<1x9x1xf32>
    %c1 = arith.constant 1 : index
    %c0_6 = arith.constant 0 : index
    %c0_7 = arith.constant 0 : index
    %c0_8 = arith.constant 0 : index
    %3 = vector.load %arg1[%c1, %c0_6, %c0_7, %c0_8] : memref<2x1x9x1xf32, #tpu.memory_space<vmem>>, vector<1x1x9x1xf32>
    %4 = vector.shape_cast %3 : vector<1x1x9x1xf32> to vector<1x9x1xf32>
    %5 = vector.extract_strided_slice %0 {offsets = [0, 0, 0], sizes = [1, 1, 512], strides = [1, 1, 1]} : vector<1x2x512xf32> to vector<1x1x512xf32>
    %6 = vector.broadcast %2 : vector<1x9x1xf32> to vector<1x9x512xf32>
    %7 = vector.broadcast %5 : vector<1x1x512xf32> to vector<1x9x512xf32>
    %8 = arith.mulf %6, %7 : vector<1x9x512xf32>
    %9 = vector.extract_strided_slice %0 {offsets = [0, 1, 0], sizes = [1, 1, 512], strides = [1, 1, 1]} : vector<1x2x512xf32> to vector<1x1x512xf32>
    %10 = vector.broadcast %4 : vector<1x9x1xf32> to vector<1x9x512xf32>
    %11 = vector.broadcast %9 : vector<1x1x512xf32> to vector<1x9x512xf32>
    %12 = arith.mulf %10, %11 : vector<1x9x512xf32>
    %13 = arith.addf %8, %12 : vector<1x9x512xf32>
    %c0_9 = arith.constant 0 : index
    %c0_10 = arith.constant 0 : index
    %c0_11 = arith.constant 0 : index
    %14 = vector.load %arg2[%c0_9, %c0_10, %c0_11] : memref<1x9x512xf32, #tpu.memory_space<vmem>>, vector<1x9x512xf32>
    %15 = arith.addf %13, %14 : vector<1x9x512xf32>
    %c0_12 = arith.constant 0 : index
    %c0_13 = arith.constant 0 : index
    %c0_14 = arith.constant 0 : index
    %16 = vector.load %arg4[%c0_12, %c0_13, %c0_14] : memref<1x9x512xf32, #tpu.memory_space<vmem>>, vector<1x9x512xf32>
    tpu.vector_store %arg4[%c0_12, %c0_13, %c0_14], %15 {strides = array<i32>} : memref<1x9x512xf32, #tpu.memory_space<vmem>>, vector<1x9x512xf32>,
    return
  }
  func.func @transform_0(%arg0: i32) -> (i32, i32, i32, i32) {
    %c0_i32 = arith.constant 0 : i32
    %c0_i32_0 = arith.constant 0 : i32
    %c0_i32_1 = arith.constant 0 : i32
    %c0_i32_2 = arith.constant 0 : i32
    %c0_i32_3 = arith.constant 0 : i32
    return %c0_i32, %c0_i32_0, %c0_i32_1, %c0_i32_2 : i32, i32, i32, i32
  }
  func.func @transform_1(%arg0: i32) -> (i32, i32, i32) {
    %c0_i32 = arith.constant 0 : i32
    %c0_i32_0 = arith.constant 0 : i32
    %c0_i32_1 = arith.constant 0 : i32
    %c0_i32_2 = arith.constant 0 : i32
    return %c0_i32, %c0_i32_0, %c0_i32_1 : i32, i32, i32
  }
  func.func @transform_2(%arg0: i32) -> (i32, i32, i32) {
    %c0_i32 = arith.constant 0 : i32
    %c0_i32_0 = arith.constant 0 : i32
    %c0_i32_1 = arith.constant 0 : i32
    return %arg0, %c0_i32, %c0_i32_0 : i32, i32, i32
  }
  func.func @transform_3(%arg0: i32) -> (i32, i32, i32) {
    %c0_i32 = arith.constant 0 : i32
    %c0_i32_0 = arith.constant 0 : i32
    %c0_i32_1 = arith.constant 0 : i32
    return %arg0, %c0_i32, %c0_i32_0 : i32, i32, i32
  }
}

</mosaic_0001>

<llo_original>
// kernel: model_forward.2
$region0: #{model_forward.2}
  #allocation0 [shape = 'u32[]', space=smem, size = 0x4, offset = 0x4, fixed_abs, tag = 'smem constant byte address 0x4 - core index']
  #allocation1 [shape = 'u32[72,128]{1,0:T(1,128)}', space=vmem, size = 0x9000, scoped, tag = 'internal scratch']
  #allocation2 [shape = 'u32[2048]{0}', space=vmem, size = 0x2000, scoped, tag = 'scoped memory for model_forward.2']
  #allocation3 [shape = 'u32[2048]{0}', space=vmem, size = 0x2000, scoped, tag = 'scoped memory for model_forward.2']
  #allocation4 [shape = 'u32[2048]{0}', space=vmem, size = 0x2000, scoped, tag = 'scoped memory for model_forward.2']
  #allocation5 [shape = 'u32[2048]{0}', space=vmem, size = 0x2000, scoped, tag = 'scoped memory for model_forward.2']
  #allocation6 [shape = 'u32[2048]{0}', space=vmem, size = 0x2000, scoped, tag = 'scoped memory for model_forward.2']
  %s0 = inlined_call_operand.vmem [shape: f32[2,1,9,1], index: 0, kind: input, shape index: {}]
  %s1 = inlined_call_operand.vmem [shape: f32[1,9,512], index: 1, kind: input, shape index: {}]
  %s2 = inlined_call_operand.vmem [shape: f32[2,2,400], index: 2, kind: input, shape index: {}]
  %s3 = inlined_call_operand.<no memory space> [shape: f32[], index: 3, kind: input, shape index: {}]
  %s4 = inlined_call_operand.vmem [shape: f32[2,9,512], index: 4, kind: output, shape index: {}]
  %s5 = sld [smem:[#allocation0]]
  $region45: #{model_forward.2} parent=0
    _
  %s7 = ssub.s32 1, %s5
  %s8 = scalar_select 0, %s7, %s5
  %v9 = vstv %s3
  loop: start=0, step=1, limit=4
  $region2: #{model_forward.2} parent=0 // loop_pre_header
    _
  $region3: #{model_forward.2} parent=0 // loop_header
    %s11 = sphi 0, %s15
    %p12 = scmp.ge.s32.totalorder %s11, 4
    %s19 = sphi 0, %s19
    %s21 = sphi 0, %s19
    %s22 = sphi 0, %s21
    %s36 = sphi 0, %s22
    %s40 = sphi 0, %s40
    %s42 = sphi 0, %s40
    %s43 = sphi 0, %s42
    %s57 = sphi 0, %s43
    %s63 = sphi 0, %s65
    %s66 = sphi 0, %s63
    %s67 = sphi 0, %s66
    %s83 = sphi 0, %s67
    %s89 = sphi 0, %s91
    %s92 = sphi 0, %s89
    %s93 = sphi 0, %s92
    %s109 = sphi 0, %s93
  $region4: #{model_forward.2} parent=0 // loop_header_branch
    %14 = sbr.rel (%p12) target = $region8
  $region5: #{model_forward.2} parent=0 // loop_body
    %s16 = ssub.s32 %s11, 1
    %s17 = ssub.s32 %s11, 2
    %s18 = sadd.s32 %s11, 1
    %s20 = sadd.s32 %s19, 1
    %p23 = scmp.eq.s32.totalorder %s11, 1
    %p24 = scmp.ne.s32.totalorder %s19, %s21
    %p25 = scmp.eq.s32.totalorder %s11, 0
    %p26 = por %p24, %p25
    %p27 = scmp.ne.s32.totalorder %s19, %s21
    %p28 = scmp.eq.s32.totalorder %s16, 1
    %p29 = por %p27, %p28
    %p30 = scmp.ne.s32.totalorder %s21, %s22
    %p31 = scmp.eq.s32.totalorder %s16, 0
    %p32 = por %p30, %p31
    %p33 = scmp.ne.s32.totalorder %s21, %s22
    %p34 = scmp.eq.s32.totalorder %s17, 1
    %p35 = por %p33, %p34
    %p37 = scmp.ne.s32.totalorder %s22, %s36
    %p38 = scmp.eq.s32.totalorder %s17, 0
    %p39 = por %p37, %p38
    %s41 = sadd.s32 %s40, 1
    %p44 = scmp.eq.s32.totalorder %s11, 1
    %p45 = scmp.ne.s32.totalorder %s40, %s42
    %p46 = scmp.eq.s32.totalorder %s11, 0
    %p47 = por %p45, %p46
    %p48 = scmp.ne.s32.totalorder %s40, %s42
    %p49 = scmp.eq.s32.totalorder %s16, 1
    %p50 = por %p48, %p49
    %p51 = scmp.ne.s32.totalorder %s42, %s43
    %p52 = scmp.eq.s32.totalorder %s16, 0
    %p53 = por %p51, %p52
    %p54 = scmp.ne.s32.totalorder %s42, %s43
    %p55 = scmp.eq.s32.totalorder %s17, 1
    %p56 = por %p54, %p55
    %p58 = scmp.ne.s32.totalorder %s43, %s57
    %p59 = scmp.eq.s32.totalorder %s17, 0
    %p60 = por %p58, %p59
    %s61 = ssub.s32 %s11, %s18
    %p62 = scmp.eq.s32.totalorder %s61, 0
    %s64 = sadd.s32 %s63, 1
    %s65 = scalar_select %p62, %s63, %s64
    %p68 = pneg %p62
    %p69 = scmp.eq.s32.totalorder %s11, 1
    %p70 = por %p68, %p69
    %p71 = scmp.ne.s32.totalorder %s63, %s66
    %p72 = scmp.eq.s32.totalorder %s11, 0
    %p73 = por %p71, %p72
    %p74 = scmp.ne.s32.totalorder %s63, %s66
    %p75 = scmp.eq.s32.totalorder %s16, 1
    %p76 = por %p74, %p75
    %p77 = scmp.ne.s32.totalorder %s66, %s67
    %p78 = scmp.eq.s32.totalorder %s16, 0
    %p79 = por %p77, %p78
    %p80 = scmp.ne.s32.totalorder %s66, %s67
    %p81 = scmp.eq.s32.totalorder %s17, 1
    %p82 = por %p80, %p81
    %p84 = scmp.ne.s32.totalorder %s67, %s83
    %p85 = scmp.eq.s32.totalorder %s17, 0
    %p86 = por %p84, %p85
    %s87 = ssub.s32 %s11, %s18
    %p88 = scmp.eq.s32.totalorder %s87, 0
    %s90 = sadd.s32 %s89, 1
    %s91 = scalar_select %p88, %s89, %s90
    %p94 = pneg %p88
    %p95 = scmp.eq.s32.totalorder %s11, 1
    %p96 = por %p94, %p95
    %p97 = scmp.ne.s32.totalorder %s89, %s92
    %p98 = scmp.eq.s32.totalorder %s11, 0
    %p99 = por %p97, %p98
    %p100 = scmp.ne.s32.totalorder %s89, %s92
    %p101 = scmp.eq.s32.totalorder %s16, 1
    %p102 = por %p100, %p101
    %p103 = scmp.ne.s32.totalorder %s92, %s93
    %p104 = scmp.eq.s32.totalorder %s16, 0
    %p105 = por %p103, %p104
    %p106 = scmp.ne.s32.totalorder %s92, %s93
    %p107 = scmp.eq.s32.totalorder %s17, 1
    %p108 = por %p106, %p107
    %p110 = scmp.ne.s32.totalorder %s93, %s109
    %p111 = scmp.eq.s32.totalorder %s17, 0
    %p112 = por %p110, %p111
    %p113 = scmp.le.s32.totalorder 1, %s11
    %p114 = scmp.lt.s32.totalorder %s11, 3
    %p115 = pnand %p113, %p114
    %p116 = pneg %p115
    // Predicated region
    $region9: #{model_forward.2} parent=5 // pred_check
      _
    $region10: #{model_forward.2} parent=5 // pred_check_branch
      %118 = sbr.rel (%p115) target = $region12
    $region11: #{model_forward.2} parent=5 // pred_region
      %s119 = ssub.s32 %s11, 1
      // Predicated region
      $region13: #{model_forward.2} parent=11 // pred_check
        %p120 = pneg %p32
      $region14: #{model_forward.2} parent=11 // pred_check_branch
        %122 = sbr.rel (%p120) target = $region16
      $region15: #{model_forward.2} parent=11 // pred_region
        _
      $region16: #{model_forward.2} parent=11 // pred_fallthru
        _
      // Predicated region
      $region17: #{model_forward.2} parent=11 // pred_check
        %p123 = pneg %p53
      $region18: #{model_forward.2} parent=11 // pred_check_branch
        %125 = sbr.rel (%p123) target = $region20
      $region19: #{model_forward.2} parent=11 // pred_region
        _
      $region20: #{model_forward.2} parent=11 // pred_fallthru
        _
    $region12: #{model_forward.2} parent=5 // pred_fallthru
      _
    %p126 = scmp.lt.s32.totalorder %s11, 2
    // Predicated region
    $region21: #{model_forward.2} parent=5 // pred_check
      %p127 = pneg %p126
    $region22: #{model_forward.2} parent=5 // pred_check_branch
      %129 = sbr.rel (%p127) target = $region24
    $region23: #{model_forward.2} parent=5 // pred_region
      // Predicated region
      $region25: #{model_forward.2} parent=23 // pred_check
        %p130 = pneg %p73
      $region26: #{model_forward.2} parent=23 // pred_check_branch
        %132 = sbr.rel (%p130) target = $region28
      $region27: #{model_forward.2} parent=23 // pred_region
        %p133 = scmp.lt.s32.totalorder %s11, 1
        %s134 = scalar_select %p133, %s11, 1
        %s135 = smul.addr %s134, 4
        %s136 = smul.addr %s135, 2
        %s137 = scalar_lea.vmem %s2, %s136
      $region28: #{model_forward.2} parent=23 // pred_fallthru
        _
    $region24: #{model_forward.2} parent=5 // pred_fallthru
      _
    %p138 = scmp.le.s32.totalorder 1, %s11
    %p139 = scmp.lt.s32.totalorder %s11, 3
    %p140 = pnand %p138, %p139
    %p141 = pneg %p140
    // Predicated region
    $region29: #{model_forward.2} parent=5 // pred_check
      _
    $region30: #{model_forward.2} parent=5 // pred_check_branch
      %143 = sbr.rel (%p140) target = $region32
    $region31: #{model_forward.2} parent=5 // pred_region
      #allocation7 [shape = 'u8[4096]{0}', space=vmem, size = 0x1000, dematerialized = true, scoped, tag = 'FusionAdapter Buffer %fusion.1 = f32[2,2,512]{2,1,0:T(2,128)} fusion(%param_2.6, %param_3), kind=kLoop, calls=%fused_computation.4.clone, metadata={op_name="jit(model_forward)/jit(_pad)/pad" stack_frame_id=30}']
      %s144 = ssub.s32 %s11, 1
      %p145 = pneg %p32
      %p146 = pneg %p29
      %p147 = pneg %p53
      %p148 = pneg %p50
      %p149 = scmp.lt.s32.totalorder %s16, 1
      %s150 = scalar_select %p149, %s16, 1
      %s151 = smul.addr %s150, 4
      %s152 = smul.addr %s151, 2
      %s153 = scalar_lea.vmem %s2, %s152
      %p154 = pneg %p79
      %p155 = pneg %p76
      %p156 = pneg %p105
      %p157 = pneg %p102
      %p158 = scmp.lt.s32.totalorder %s16, 1
      %s159 = scalar_select %p158, %s16, 1
      %s160 = smul.addr %s159, 8
      %s161 = smul.addr %s160, 8
      %s162 = scalar_lea.vmem %s4, %s161
      %p163 = scmp.lt.s32.totalorder %s16, 1
      %s164 = scalar_select %p163, %s16, 1
      %s165 = smul.addr %s164, 4
      %s166 = smul.addr %s165, 2
      %s167 = scalar_lea.vmem %s2, %s166
      %p168 = scmp.lt.s32.totalorder %s16, 1
      %s169 = scalar_select %p168, %s16, 1
      %s170 = smul.addr %s169, 8
      %s171 = smul.addr %s170, 8
      %s172 = scalar_lea.vmem %s4, %s171
      %v173 = vld [vmem:[%s167] sm:$0x3]
      %v174 = vlaneseq
      %v175 = vshrl.u32 %v174, 7
      %vm177 = vcmp.lt.s32.totalorder %v175, 2
      %v178 = vsel %vm177, %v173, %v9
      %v179 = vlaneseq
      %v180 = vand.u32 %v179, 127
      %vm182 = vcmp.lt.s32.totalorder %v180, 400
      %v183 = vsel %vm182, %v178, %v9
      %s185 = ssub.s32 4, 1
      %186 = vst [vmem:[#allocation7] sm:%s185] %v183
      %s187 = scalar_lea.vmem %s167, 2
      %v188 = vld [vmem:[%s187] sm:$0x3]
      %v189 = vlaneseq
      %v190 = vshrl.u32 %v189, 7
      %vm192 = vcmp.lt.s32.totalorder %v190, 2
      %v193 = vsel %vm192, %v188, %v9
      %v194 = vlaneseq
      %v195 = vand.u32 %v194, 127
      %v196 = vadd.s32 %v195, 128
      %vm197 = vcmp.lt.s32.totalorder %v196, 400
      %v198 = vsel %vm197, %v193, %v9
      %s199 = scalar_lea.vmem [#allocation7], 2
      %s201 = ssub.s32 4, 1
      %202 = vst [vmem:[%s199] sm:%s201] %v198
      %s203 = scalar_lea.vmem %s167, 4
      %v204 = vld [vmem:[%s203] sm:$0x3]
      %v205 = vlaneseq
      %v206 = vshrl.u32 %v205, 7
      %vm208 = vcmp.lt.s32.totalorder %v206, 2
      %v209 = vsel %vm208, %v204, %v9
      %v210 = vlaneseq
      %v211 = vand.u32 %v210, 127
      %v212 = vadd.s32 %v211, 256
      %vm213 = vcmp.lt.s32.totalorder %v212, 400
      %v214 = vsel %vm213, %v209, %v9
      %s215 = scalar_lea.vmem [#allocation7], 4
      %s217 = ssub.s32 4, 1
      %218 = vst [vmem:[%s215] sm:%s217] %v214
      %s219 = scalar_lea.vmem %s167, 6
      %v220 = vld [vmem:[%s219] sm:$0x3]
      %v221 = vlaneseq
      %v222 = vshrl.u32 %v221, 7
      %vm224 = vcmp.lt.s32.totalorder %v222, 2
      %v225 = vsel %vm224, %v220, %v9
      %v226 = vlaneseq
      %v227 = vand.u32 %v226, 127
      %v228 = vadd.s32 %v227, 384
      %vm229 = vcmp.lt.s32.totalorder %v228, 400
      %v230 = vsel %vm229, %v225, %v9
      %s231 = scalar_lea.vmem [#allocation7], 6
      %s233 = ssub.s32 4, 1
      %234 = vst [vmem:[%s231] sm:%s233] %v230
      %v235 = vld [vmem:[#allocation7] sm:$0xff]
      %v236 = vld [vmem:[%s0] sm:$0xff]
      %v237 = vld [vmem:[%s0 + $0x8] sm:$0x1]
      %s238 = scalar_lea.vmem %s0, 16
      %v239 = vld [vmem:[%s238] sm:$0xff]
      %v240 = vld [vmem:[%s238 + $0x8] sm:$0x1]
      %242 = vset.pattern.permute.xlu0 0
      %243 = vperm.xlu0 %242, %v236
      %v244 = vpop.permute.xlu0 %243
      %247 = vset.pattern.permute.xlu0 0
      %248 = vperm.xlu0 %247, %v237
      %v249 = vpop.permute.xlu0 %248
      %v252 = vperm.slane %v235, 0
      %v253 = vperm.slane %v235, 2
      %v254 = vperm.slane %v235, 4
      %v255 = vperm.slane %v235, 6
      %v260 = vperm.slane %v252, 0
      %v261 = vperm.slane %v253, 0
      %v262 = vperm.slane %v254, 0
      %v263 = vperm.slane %v255, 0
      %v264 = vmul.f32 %v244, %v260
      %v265 = vmul.f32 %v244, %v261
      %v266 = vmul.f32 %v244, %v262
      %v267 = vmul.f32 %v244, %v263
      %v268 = vmul.f32 %v249, %v260
      %v269 = vmul.f32 %v249, %v261
      %v270 = vmul.f32 %v249, %v262
      %v271 = vmul.f32 %v249, %v263
      %273 = vset.pattern.permute.xlu0 0
      %274 = vperm.xlu0 %273, %v239
      %v275 = vpop.permute.xlu0 %274
      %278 = vset.pattern.permute.xlu0 0
      %279 = vperm.xlu0 %278, %v240
      %v280 = vpop.permute.xlu0 %279
      %v282 = vperm.slane %v235, 1
      %v283 = vperm.slane %v235, 3
      %v284 = vperm.slane %v235, 5
      %v285 = vperm.slane %v235, 7
      %v290 = vperm.slane %v282, 1
      %v291 = vperm.slane %v283, 1
      %v292 = vperm.slane %v284, 1
      %v293 = vperm.slane %v285, 1
      %v294 = vmul.f32 %v275, %v290
      %v295 = vmul.f32 %v275, %v291
      %v296 = vmul.f32 %v275, %v292
      %v297 = vmul.f32 %v275, %v293
      %v298 = vmul.f32 %v280, %v290
      %v299 = vmul.f32 %v280, %v291
      %v300 = vmul.f32 %v280, %v292
      %v301 = vmul.f32 %v280, %v293
      %v302 = vadd.f32 %v264, %v294
      %v303 = vadd.f32 %v265, %v295
      %v304 = vadd.f32 %v266, %v296
      %v305 = vadd.f32 %v267, %v297
      %v306 = vadd.f32 %v268, %v298
      %v307 = vadd.f32 %v269, %v299
      %v308 = vadd.f32 %v270, %v300
      %v309 = vadd.f32 %v271, %v301
      %v310 = vld [vmem:[%s1] sm:$0xff]
      %v311 = vld [vmem:[%s1 + $0x8] sm:$0xff]
      %v312 = vld [vmem:[%s1 + $0x10] sm:$0xff]
      %v313 = vld [vmem:[%s1 + $0x18] sm:$0xff]
      %v314 = vld [vmem:[%s1 + $0x20] sm:$0x1]
      %v315 = vld [vmem:[%s1 + $0x28] sm:$0x1]
      %v316 = vld [vmem:[%s1 + $0x30] sm:$0x1]
      %v317 = vld [vmem:[%s1 + $0x38] sm:$0x1]
      %v318 = vadd.f32 %v302, %v310
      %v319 = vadd.f32 %v303, %v311
      %v320 = vadd.f32 %v304, %v312
      %v321 = vadd.f32 %v305, %v313
      %v322 = vadd.f32 %v306, %v314
      %v323 = vadd.f32 %v307, %v315
      %v324 = vadd.f32 %v308, %v316
      %v325 = vadd.f32 %v309, %v317
      %326 = vst [vmem:[%s172] sm:$0xff] %v318
      %327 = vst [vmem:[%s172 + $0x8] sm:$0xff] %v319
      %328 = vst [vmem:[%s172 + $0x10] sm:$0xff] %v320
      %329 = vst [vmem:[%s172 + $0x18] sm:$0xff] %v321
      %330 = vst [vmem:[%s172 + $0x20] sm:$0x1] %v322
      %331 = vst [vmem:[%s172 + $0x28] sm:$0x1] %v323
      %332 = vst [vmem:[%s172 + $0x30] sm:$0x1] %v324
      %333 = vst [vmem:[%s172 + $0x38] sm:$0x1] %v325
      %p334 = scmp.lt.s32.totalorder %s16, 1
      %s335 = scalar_select %p334, %s16, 1
      %s336 = smul.addr %s335, 8
      %s337 = smul.addr %s336, 8
      %s338 = scalar_lea.vmem %s4, %s337
      // Predicated region
      $region33: #{model_forward.2} parent=31 // pred_check
        %p339 = pneg %p102
      $region34: #{model_forward.2} parent=31 // pred_check_branch
        %341 = sbr.rel (%p339) target = $region36
      $region35: #{model_forward.2} parent=31 // pred_region
        _
      $region36: #{model_forward.2} parent=31 // pred_fallthru
        _
    $region32: #{model_forward.2} parent=5 // pred_fallthru
      _
    %p342 = scmp.le.s32.totalorder 2, %s11
    // Predicated region
    $region37: #{model_forward.2} parent=5 // pred_check
      %p343 = pneg %p342
    $region38: #{model_forward.2} parent=5 // pred_check_branch
      %345 = sbr.rel (%p343) target = $region40
    $region39: #{model_forward.2} parent=5 // pred_region
      %s346 = ssub.s32 %s11, 2
      // Predicated region
      $region41: #{model_forward.2} parent=39 // pred_check
        %p347 = pneg %p108
      $region42: #{model_forward.2} parent=39 // pred_check_branch
        %349 = sbr.rel (%p347) target = $region44
      $region43: #{model_forward.2} parent=39 // pred_region
        %p350 = scmp.lt.s32.totalorder %s17, 1
        %s351 = scalar_select %p350, %s17, 1
        %s352 = smul.addr %s351, 8
        %s353 = smul.addr %s352, 8
        %s354 = scalar_lea.vmem %s4, %s353
      $region44: #{model_forward.2} parent=39 // pred_fallthru
        _
    $region40: #{model_forward.2} parent=5 // pred_fallthru
      _
  $region6: #{model_forward.2} parent=0 // loop_footer
    %s15 = sadd.s32 1, %s11
  $region7: #{model_forward.2} parent=0 // loop_footer_branch
    %10 = sbr.rel target = $region3
  $region8: #{model_forward.2} parent=0 // loop_exit
    _

</llo_original>
